<compile_context>
chip_gen: v6e
topology: v6e:2x2x1
jax: 0.10.0
libtpu: 0.0.40
codegen_flags: <defaults>
</compile_context>

<pallas_src>
import functools

import jax
import jax.numpy as jnp
import numpy as np
from jax import lax
from jax.experimental import pallas as pl
from jax.experimental.pallas import tpu as pltpu


def _hybrid_loss_kernel(pred_ref, targ_ref,
                        bce_ref, inter_ref, union_ref, lap_ref,
                        *, H, W, K, P):
    """Per-image partial sums for HybridLoss.

    Block shapes:
      pred_ref / targ_ref                        : (1, H, W)   one image per grid step
      bce_ref / inter_ref / union_ref / lap_ref  : (1, 1, 1)   per-image scalars
    """
    f32 = jnp.float32
    p = pred_ref[0].astype(f32)      # (H, W)
    t = targ_ref[0].astype(f32)

    # ---- compile-time-constant band matrices (2-D iota compares, VPU only) --------
    # Box-filter band: A[i, j] = 1 iff |i - j| <= P.  avg_pool2d's zero padding is
    # handled implicitly by clipping the band at the edges.  (For binary masks these
    # matmuls would also be exact in bf16 with f32 accumulation.)
    def box_band(n):
        i = lax.broadcasted_iota(jnp.int32, (n, n), 0)
        j = lax.broadcasted_iota(jnp.int32, (n, n), 1)
        return (jnp.abs(i - j) <= P).astype(f32)

    # Laplacian second-difference band: tridiagonal [1, -2, 1] (zero-padded conv).
    def lap_band(n):
        i = lax.broadcasted_iota(jnp.int32, (n, n), 0)
        j = lax.broadcasted_iota(jnp.int32, (n, n), 1)
        d = jnp.abs(i - j)
        return jnp.where(d == 0, -2.0, jnp.where(d == 1, 1.0, 0.0)).astype(f32)

    A_H, A_W = box_band(H), box_band(W)
    T_H, T_W = lap_band(H), lap_band(W)

    def sum2d(v):  # (H, W) -> (1, 1): lane reduce, then sublane reduce
        return jnp.sum(jnp.sum(v, axis=1, keepdims=True), axis=0, keepdims=True)

    # ---- structure_loss partials ---------------------------------------------------
    # 31x31 box filter (stride 1, pad 15, count_include_pad=True) as two MXU matmuls.
    rows = jnp.dot(t, A_W, preferred_element_type=f32)         # W-direction window sums
    box = jnp.dot(A_H, rows, preferred_element_type=f32)       # full 31x31 window sums
    weit = 1.0 + 5.0 * jnp.abs(box * (1.0 / float(K * K)) - t)

    # One EUP exp pass feeds both the BCE softplus term and sigmoid(pred).
    e = jnp.exp(-jnp.abs(p))                                   # exp(-|p|)
    bce = jnp.maximum(p, 0.0) - p * t + jnp.log(1.0 + e)       # stable BCE-with-logits
    inv1pe = 1.0 / (1.0 + e)                                   # exact divide (tolerance)
    ps = jnp.where(p >= 0.0, 1.0, e) * inv1pe                  # sigmoid(p)

    twt = t * weit
    pwt = ps * weit
    bce_ref[0] = sum2d(bce)                                    # sum of element-wise BCE
    inter_ref[0] = sum2d(twt * ps)                             # sum(ps * t * weit)
    union_ref[0] = sum2d(pwt) + sum2d(twt)                     # sum((ps + t) * weit)

    # ---- frequency_loss partial: lap(ps) - lap(t) == lap(ps - t) (linear operator) --
    d = ps - t
    lap_d = (jnp.dot(T_H, d, preferred_element_type=f32)
             + jnp.dot(d, T_W, preferred_element_type=f32))
    lap_ref[0] = sum2d(jnp.abs(lap_d))


def hybrid_loss(pred, target):
    """HybridLoss.forward(pred, target) -> scalar.  pred/target: (N, 1, H, W)."""
    N, C, H, W = pred.shape
    assert target.shape == pred.shape
    # frequency_loss uses a (1,1,3,3) conv kernel => single-channel inputs only.
    assert C == 1, "HybridLoss requires single-channel pred/target"
    NC = N * C
    K, P = 31, 15                      # avg_pool2d(kernel_size=31, stride=1, padding=15)

    # Free leading-dim merge; native dtype is kept, upcast happens inside the kernel.
    p3 = pred.reshape(NC, H, W)
    t3 = target.reshape(NC, H, W)

    kernel = functools.partial(_hybrid_loss_kernel, H=H, W=W, K=K, P=P)

    img_spec = pl.BlockSpec((1, H, W), lambda n: (n, 0, 0))
    out_spec = pl.BlockSpec((1, 1, 1), lambda n: (n, 0, 0))
    out_shapes = tuple(jax.ShapeDtypeStruct((NC, 1, 1), jnp.float32) for _ in range(4))

    sum_bce, inter, union, sum_lap = pl.pallas_call(
        kernel,
        out_shape=out_shapes,
        grid_spec=pltpu.PrefetchScalarGridSpec(
            num_scalar_prefetch=0,
            grid=(NC,),                                    # one image per grid step
            in_specs=[img_spec, img_spec],
            out_specs=[out_spec, out_spec, out_spec, out_spec],
        ),
        compiler_params=pltpu.CompilerParams(
            dimension_semantics=("parallel",),             # independent images
            vmem_limit_bytes=48 * 1024 * 1024,             # safe on v5e/v6e/v7x
        ),
    )(p3, t3)

    inv_elems = 1.0 / float(NC * H * W)
    sum_bce = sum_bce.reshape(NC)
    inter = inter.reshape(NC)
    union = union.reshape(NC)
    sum_lap = sum_lap.reshape(NC)

    # Legacy reduce='none' -> reduction='mean': wbce is the global BCE mean, and
    # (weit * scalar).sum / weit.sum == scalar, so per-image wbce == bce_mean.
    bce_mean = jnp.sum(sum_bce) * inv_elems
    wiou = 1.0 - (inter + 1.0) / (union - inter + 1.0)
    loss_struct = bce_mean + jnp.mean(wiou)
    loss_freq = jnp.sum(sum_lap) * inv_elems
    return loss_struct + 0.2 * loss_freq


def _reference(pred, target):
    """Pure-JAX replica of the literal PyTorch HybridLoss.forward behaviour."""
    win = lax.reduce_window(
        target, 0.0, lax.add,
        window_dimensions=(1, 1, 31, 31), window_strides=(1, 1, 1, 1),
        padding=((0, 0), (0, 0), (15, 15), (15, 15)))
    avg = win / (31.0 * 31.0)
    weit = 1.0 + 5.0 * jnp.abs(avg - target)

    bce = (jnp.maximum(pred, 0.0) - pred * target
           + jnp.log(1.0 + jnp.exp(-jnp.abs(pred))))
    wbce_scalar = jnp.mean(bce)        # PyTorch legacy reduce='none' -> reduction='mean'
    wbce = (weit * wbce_scalar).sum(axis=(2, 3)) / weit.sum(axis=(2, 3))

    ps = jax.nn.sigmoid(pred)
    inter = (ps * target * weit).sum(axis=(2, 3))
    union = ((ps + target) * weit).sum(axis=(2, 3))
    wiou = 1.0 - (inter + 1.0) / (union - inter + 1.0)
    loss_struct = jnp.mean(wbce + wiou)

    lap = jnp.array([[0., 1., 0.], [1., -4., 1.], [0., 1., 0.]],
                    dtype=jnp.float32).reshape(1, 1, 3, 3)

    def conv_lap(x):
        return lax.conv_general_dilated(
            x, lap, window_strides=(1, 1), padding=((1, 1), (1, 1)),
            dimension_numbers=("NCHW", "OIHW", "NCHW"))

    loss_freq = jnp.mean(jnp.abs(conv_lap(ps) - conv_lap(target)))
    return loss_struct + 0.2 * loss_freq


if __name__ == "__main__":
    # HybridLoss on segmentation-style logits/masks: (N, 1, H, W)
    N, C, H, W = 2, 1, 16, 16
    key = jax.random.PRNGKey(0)
    kp, kt = jax.random.split(key)
    pred = jax.random.normal(kp, (N, C, H, W), dtype=jnp.float32)
    target = (jax.random.uniform(kt, (N, C, H, W)) > 0.5).astype(jnp.float32)

    loss = hybrid_loss(pred, target)
    loss = jax.block_until_ready(loss)

    ref = _reference(pred, target)
    np.testing.assert_allclose(np.asarray(loss), np.asarray(ref), rtol=1e-4, atol=1e-4)
    print("KERNEL_OK")
</pallas_src>

<mosaic_0001>
module attributes {stable_mosaic.version = 11 : i64} {
  func.func @_hybrid_loss_kernel(%arg0: i32, %arg1: memref<1x16x16xf32, #tpu.memory_space<vmem>>, %arg2: memref<1x16x16xf32, #tpu.memory_space<vmem>>, %arg3: memref<1x1x1xf32, #tpu.memory_space<vmem>>, %arg4: memref<1x1x1xf32, #tpu.memory_space<vmem>>, %arg5: memref<1x1x1xf32, #tpu.memory_space<vmem>>, %arg6: memref<1x1x1xf32, #tpu.memory_space<vmem>>) attributes {dimension_semantics = [#tpu.dimension_semantics<parallel>], iteration_bounds = array<i64: 2>, scalar_prefetch = 0 : i64, scratch_operands = 0 : i64, tpu.core_type = #tpu.core_type<tc>, window_params = [{transform_indices = @transform_0, window_bounds = array<i64: 1, 16, 16>}, {transform_indices = @transform_1, window_bounds = array<i64: 1, 16, 16>}, {transform_indices = @transform_2, window_bounds = array<i64: 1, 1, 1>}, {transform_indices = @transform_3, window_bounds = array<i64: 1, 1, 1>}, {transform_indices = @transform_4, window_bounds = array<i64: 1, 1, 1>}, {transform_indices = @transform_5, window_bounds = array<i64: 1, 1, 1>}]} {
    %c0 = arith.constant 0 : index
    %c0_0 = arith.constant 0 : index
    %c0_1 = arith.constant 0 : index
    %0 = vector.load %arg1[%c0, %c0_0, %c0_1] : memref<1x16x16xf32, #tpu.memory_space<vmem>>, vector<1x16x16xf32>
    %1 = vector.shape_cast %0 : vector<1x16x16xf32> to vector<16x16xf32>
    %c0_2 = arith.constant 0 : index
    %c0_3 = arith.constant 0 : index
    %c0_4 = arith.constant 0 : index
    %2 = vector.load %arg2[%c0_2, %c0_3, %c0_4] : memref<1x16x16xf32, #tpu.memory_space<vmem>>, vector<1x16x16xf32>
    %3 = vector.shape_cast %2 : vector<1x16x16xf32> to vector<16x16xf32>
    %4 = tpu.iota {dimensions = array<i32: 0>} : vector<16x16xi32>
    %5 = tpu.iota {dimensions = array<i32: 1>} : vector<16x16xi32>
    %6 = arith.subi %4, %5 : vector<16x16xi32>
    %7 = math.absi %6 : vector<16x16xi32>
    %c15_i32 = arith.constant 15 : i32
    %8 = vector.broadcast %c15_i32 : i32 to vector<16x16xi32>
    %9 = arith.cmpi sle, %7, %8 : vector<16x16xi32>
    %10 = arith.extui %9 : vector<16x16xi1> to vector<16x16xi32>
    %11 = arith.sitofp %10 : vector<16x16xi32> to vector<16x16xf32>
    %12 = tpu.iota {dimensions = array<i32: 0>} : vector<16x16xi32>
    %13 = tpu.iota {dimensions = array<i32: 1>} : vector<16x16xi32>
    %14 = arith.subi %12, %13 : vector<16x16xi32>
    %15 = math.absi %14 : vector<16x16xi32>
    %c15_i32_5 = arith.constant 15 : i32
    %16 = vector.broadcast %c15_i32_5 : i32 to vector<16x16xi32>
    %17 = arith.cmpi sle, %15, %16 : vector<16x16xi32>
    %18 = arith.extui %17 : vector<16x16xi1> to vector<16x16xi32>
    %19 = arith.sitofp %18 : vector<16x16xi32> to vector<16x16xf32>
    %20 = tpu.iota {dimensions = array<i32: 0>} : vector<16x16xi32>
    %21 = tpu.iota {dimensions = array<i32: 1>} : vector<16x16xi32>
    %22 = arith.subi %20, %21 : vector<16x16xi32>
    %23 = math.absi %22 : vector<16x16xi32>
    %c0_i32 = arith.constant 0 : i32
    %24 = vector.broadcast %c0_i32 : i32 to vector<16x16xi32>
    %25 = arith.cmpi eq, %23, %24 : vector<16x16xi32>
    %c1_i32 = arith.constant 1 : i32
    %26 = vector.broadcast %c1_i32 : i32 to vector<16x16xi32>
    %27 = arith.cmpi eq, %23, %26 : vector<16x16xi32>
    %cst = arith.constant 1.000000e+00 : f32
    %cst_6 = arith.constant 0.000000e+00 : f32
    %28 = vector.broadcast %cst : f32 to vector<16x16xf32>
    %29 = vector.broadcast %cst_6 : f32 to vector<16x16xf32>
    %30 = arith.select %27, %28, %29 : vector<16x16xi1>, vector<16x16xf32>
    %cst_7 = arith.constant -2.000000e+00 : f32
    %31 = vector.broadcast %cst_7 : f32 to vector<16x16xf32>
    %32 = arith.select %25, %31, %30 : vector<16x16xi1>, vector<16x16xf32>
    %33 = tpu.iota {dimensions = array<i32: 0>} : vector<16x16xi32>
    %34 = tpu.iota {dimensions = array<i32: 1>} : vector<16x16xi32>
    %35 = arith.subi %33, %34 : vector<16x16xi32>
    %36 = math.absi %35 : vector<16x16xi32>
    %c0_i32_8 = arith.constant 0 : i32
    %37 = vector.broadcast %c0_i32_8 : i32 to vector<16x16xi32>
    %38 = arith.cmpi eq, %36, %37 : vector<16x16xi32>
    %c1_i32_9 = arith.constant 1 : i32
    %39 = vector.broadcast %c1_i32_9 : i32 to vector<16x16xi32>
    %40 = arith.cmpi eq, %36, %39 : vector<16x16xi32>
    %cst_10 = arith.constant 1.000000e+00 : f32
    %cst_11 = arith.constant 0.000000e+00 : f32
    %41 = vector.broadcast %cst_10 : f32 to vector<16x16xf32>
    %42 = vector.broadcast %cst_11 : f32 to vector<16x16xf32>
    %43 = arith.select %40, %41, %42 : vector<16x16xi1>, vector<16x16xf32>
    %cst_12 = arith.constant -2.000000e+00 : f32
    %44 = vector.broadcast %cst_12 : f32 to vector<16x16xf32>
    %45 = arith.select %38, %44, %43 : vector<16x16xi1>, vector<16x16xf32>
    %cst_13 = arith.constant dense<0.000000e+00> : vector<16x16xf32>
    %46 = tpu.matmul %3, %19, %cst_13 {dimension_numbers = #tpu.dot_dimension_numbers<[1], [0], [0], [1], [0, 0, 1, 1], [], []>} : vector<16x16xf32>, vector<16x16xf32>, vector<16x16xf32> -> vector<16x16xf32>
    %cst_14 = arith.constant dense<0.000000e+00> : vector<16x16xf32>
    %47 = tpu.matmul %11, %46, %cst_14 {dimension_numbers = #tpu.dot_dimension_numbers<[1], [0], [0], [1], [0, 0, 1, 1], [], []>} : vector<16x16xf32>, vector<16x16xf32>, vector<16x16xf32> -> vector<16x16xf32>
    %cst_15 = arith.constant 0.00104058278 : f32
    %48 = vector.broadcast %cst_15 : f32 to vector<16x16xf32>
    %49 = arith.mulf %47, %48 : vector<16x16xf32>
    %50 = arith.subf %49, %3 : vector<16x16xf32>
    %51 = math.absf %50 : vector<16x16xf32>
    %cst_16 = arith.constant 5.000000e+00 : f32
    %52 = vector.broadcast %cst_16 : f32 to vector<16x16xf32>
    %53 = arith.mulf %52, %51 : vector<16x16xf32>
    %cst_17 = arith.constant 1.000000e+00 : f32
    %54 = vector.broadcast %cst_17 : f32 to vector<16x16xf32>
    %55 = arith.addf %54, %53 : vector<16x16xf32>
    %56 = math.absf %1 : vector<16x16xf32>
    %cst_18 = arith.constant 0.000000e+00 : f32
    %57 = vector.broadcast %cst_18 : f32 to vector<16x16xf32>
    %58 = arith.subf %57, %56 : vector<16x16xf32>
    %59 = math.exp %58 : vector<16x16xf32>
    %cst_19 = arith.constant 0.000000e+00 : f32
    %60 = vector.broadcast %cst_19 : f32 to vector<16x16xf32>
    %61 = arith.maximumf %1, %60 : vector<16x16xf32>
    %62 = arith.mulf %1, %3 : vector<16x16xf32>
    %63 = arith.subf %61, %62 : vector<16x16xf32>
    %cst_20 = arith.constant 1.000000e+00 : f32
    %64 = vector.broadcast %cst_20 : f32 to vector<16x16xf32>
    %65 = arith.addf %64, %59 : vector<16x16xf32>
    %66 = math.log %65 : vector<16x16xf32>
    %67 = arith.addf %63, %66 : vector<16x16xf32>
    %cst_21 = arith.constant 1.000000e+00 : f32
    %68 = vector.broadcast %cst_21 : f32 to vector<16x16xf32>
    %69 = arith.addf %68, %59 : vector<16x16xf32>
    %cst_22 = arith.constant 1.000000e+00 : f32
    %70 = vector.broadcast %cst_22 : f32 to vector<16x16xf32>
    %71 = arith.divf %70, %69 : vector<16x16xf32>
    %cst_23 = arith.constant 0.000000e+00 : f32
    %72 = vector.broadcast %cst_23 : f32 to vector<16x16xf32>
    %73 = arith.cmpf oge, %1, %72 : vector<16x16xf32>
    %cst_24 = arith.constant 1.000000e+00 : f32
    %74 = vector.broadcast %cst_24 : f32 to vector<16x16xf32>
    %75 = arith.select %73, %74, %59 : vector<16x16xi1>, vector<16x16xf32>
    %76 = arith.mulf %75, %71 : vector<16x16xf32>
    %77 = arith.mulf %3, %55 : vector<16x16xf32>
    %78 = arith.mulf %76, %55 : vector<16x16xf32>
    %cst_25 = arith.constant dense<0.000000e+00> : vector<16xf32>
    %79 = vector.multi_reduction <add>, %67, %cst_25 [1] : vector<16x16xf32> to vector<16xf32>
    %80 = vector.shape_cast %79 : vector<16xf32> to vector<16x1xf32>
    %cst_26 = arith.constant dense<0.000000e+00> : vector<1xf32>
    %81 = vector.multi_reduction <add>, %80, %cst_26 [0] : vector<16x1xf32> to vector<1xf32>
    %82 = vector.shape_cast %81 : vector<1xf32> to vector<1x1xf32>
    %c0_27 = arith.constant 0 : index
    %c0_28 = arith.constant 0 : index
    %c0_29 = arith.constant 0 : index
    %83 = vector.load %arg3[%c0_27, %c0_28, %c0_29] : memref<1x1x1xf32, #tpu.memory_space<vmem>>, vector<1x1x1xf32>
    %84 = vector.shape_cast %83 : vector<1x1x1xf32> to vector<1x1xf32>
    %85 = vector.shape_cast %82 : vector<1x1xf32> to vector<1x1x1xf32>
    tpu.vector_store %arg3[%c0_27, %c0_28, %c0_29], %85 {strides = array<i32>} : memref<1x1x1xf32, #tpu.memory_space<vmem>>, vector<1x1x1xf32>,
    %86 = arith.mulf %77, %76 : vector<16x16xf32>
    %cst_30 = arith.constant dense<0.000000e+00> : vector<16xf32>
    %87 = vector.multi_reduction <add>, %86, %cst_30 [1] : vector<16x16xf32> to vector<16xf32>
    %88 = vector.shape_cast %87 : vector<16xf32> to vector<16x1xf32>
    %cst_31 = arith.constant dense<0.000000e+00> : vector<1xf32>
    %89 = vector.multi_reduction <add>, %88, %cst_31 [0] : vector<16x1xf32> to vector<1xf32>
    %90 = vector.shape_cast %89 : vector<1xf32> to vector<1x1xf32>
    %c0_32 = arith.constant 0 : index
    %c0_33 = arith.constant 0 : index
    %c0_34 = arith.constant 0 : index
    %91 = vector.load %arg4[%c0_32, %c0_33, %c0_34] : memref<1x1x1xf32, #tpu.memory_space<vmem>>, vector<1x1x1xf32>
    %92 = vector.shape_cast %91 : vector<1x1x1xf32> to vector<1x1xf32>
    %93 = vector.shape_cast %90 : vector<1x1xf32> to vector<1x1x1xf32>
    tpu.vector_store %arg4[%c0_32, %c0_33, %c0_34], %93 {strides = array<i32>} : memref<1x1x1xf32, #tpu.memory_space<vmem>>, vector<1x1x1xf32>,
    %cst_35 = arith.constant dense<0.000000e+00> : vector<16xf32>
    %94 = vector.multi_reduction <add>, %78, %cst_35 [1] : vector<16x16xf32> to vector<16xf32>
    %95 = vector.shape_cast %94 : vector<16xf32> to vector<16x1xf32>
    %cst_36 = arith.constant dense<0.000000e+00> : vector<1xf32>
    %96 = vector.multi_reduction <add>, %95, %cst_36 [0] : vector<16x1xf32> to vector<1xf32>
    %97 = vector.shape_cast %96 : vector<1xf32> to vector<1x1xf32>
    %cst_37 = arith.constant dense<0.000000e+00> : vector<16xf32>
    %98 = vector.multi_reduction <add>, %77, %cst_37 [1] : vector<16x16xf32> to vector<16xf32>
    %99 = vector.shape_cast %98 : vector<16xf32> to vector<16x1xf32>
    %cst_38 = arith.constant dense<0.000000e+00> : vector<1xf32>
    %100 = vector.multi_reduction <add>, %99, %cst_38 [0] : vector<16x1xf32> to vector<1xf32>
    %101 = vector.shape_cast %100 : vector<1xf32> to vector<1x1xf32>
    %102 = arith.addf %97, %101 : vector<1x1xf32>
    %c0_39 = arith.constant 0 : index
    %c0_40 = arith.constant 0 : index
    %c0_41 = arith.constant 0 : index
    %103 = vector.load %arg5[%c0_39, %c0_40, %c0_41] : memref<1x1x1xf32, #tpu.memory_space<vmem>>, vector<1x1x1xf32>
    %104 = vector.shape_cast %103 : vector<1x1x1xf32> to vector<1x1xf32>
    %105 = vector.shape_cast %102 : vector<1x1xf32> to vector<1x1x1xf32>
    tpu.vector_store %arg5[%c0_39, %c0_40, %c0_41], %105 {strides = array<i32>} : memref<1x1x1xf32, #tpu.memory_space<vmem>>, vector<1x1x1xf32>,
    %106 = arith.subf %76, %3 : vector<16x16xf32>
    %cst_42 = arith.constant dense<0.000000e+00> : vector<16x16xf32>
    %107 = tpu.matmul %32, %106, %cst_42 {dimension_numbers = #tpu.dot_dimension_numbers<[1], [0], [0], [1], [0, 0, 1, 1], [], []>} : vector<16x16xf32>, vector<16x16xf32>, vector<16x16xf32> -> vector<16x16xf32>
    %cst_43 = arith.constant dense<0.000000e+00> : vector<16x16xf32>
    %108 = tpu.matmul %106, %45, %cst_43 {dimension_numbers = #tpu.dot_dimension_numbers<[1], [0], [0], [1], [0, 0, 1, 1], [], []>} : vector<16x16xf32>, vector<16x16xf32>, vector<16x16xf32> -> vector<16x16xf32>
    %109 = arith.addf %107, %108 : vector<16x16xf32>
    %110 = math.absf %109 : vector<16x16xf32>
    %cst_44 = arith.constant dense<0.000000e+00> : vector<16xf32>
    %111 = vector.multi_reduction <add>, %110, %cst_44 [1] : vector<16x16xf32> to vector<16xf32>
    %112 = vector.shape_cast %111 : vector<16xf32> to vector<16x1xf32>
    %cst_45 = arith.constant dense<0.000000e+00> : vector<1xf32>
    %113 = vector.multi_reduction <add>, %112, %cst_45 [0] : vector<16x1xf32> to vector<1xf32>
    %114 = vector.shape_cast %113 : vector<1xf32> to vector<1x1xf32>
    %c0_46 = arith.constant 0 : index
    %c0_47 = arith.constant 0 : index
    %c0_48 = arith.constant 0 : index
    %115 = vector.load %arg6[%c0_46, %c0_47, %c0_48] : memref<1x1x1xf32, #tpu.memory_space<vmem>>, vector<1x1x1xf32>
    %116 = vector.shape_cast %115 : vector<1x1x1xf32> to vector<1x1xf32>
    %117 = vector.shape_cast %114 : vector<1x1xf32> to vector<1x1x1xf32>
    tpu.vector_store %arg6[%c0_46, %c0_47, %c0_48], %117 {strides = array<i32>} : memref<1x1x1xf32, #tpu.memory_space<vmem>>, vector<1x1x1xf32>,
    return
  }
  func.func @transform_0(%arg0: i32) -> (i32, i32, i32) {
    %c0_i32 = arith.constant 0 : i32
    %c0_i32_0 = arith.constant 0 : i32
    %c0_i32_1 = arith.constant 0 : i32
    return %arg0, %c0_i32, %c0_i32_0 : i32, i32, i32
  }
  func.func @transform_1(%arg0: i32) -> (i32, i32, i32) {
    %c0_i32 = arith.constant 0 : i32
    %c0_i32_0 = arith.constant 0 : i32
    %c0_i32_1 = arith.constant 0 : i32
    return %arg0, %c0_i32, %c0_i32_0 : i32, i32, i32
  }
  func.func @transform_2(%arg0: i32) -> (i32, i32, i32) {
    %c0_i32 = arith.constant 0 : i32
    %c0_i32_0 = arith.constant 0 : i32
    %c0_i32_1 = arith.constant 0 : i32
    return %arg0, %c0_i32, %c0_i32_0 : i32, i32, i32
  }
  func.func @transform_3(%arg0: i32) -> (i32, i32, i32) {
    %c0_i32 = arith.constant 0 : i32
    %c0_i32_0 = arith.constant 0 : i32
    %c0_i32_1 = arith.constant 0 : i32
    return %arg0, %c0_i32, %c0_i32_0 : i32, i32, i32
  }
  func.func @transform_4(%arg0: i32) -> (i32, i32, i32) {
    %c0_i32 = arith.constant 0 : i32
    %c0_i32_0 = arith.constant 0 : i32
    %c0_i32_1 = arith.constant 0 : i32
    return %arg0, %c0_i32, %c0_i32_0 : i32, i32, i32
  }
  func.func @transform_5(%arg0: i32) -> (i32, i32, i32) {
    %c0_i32 = arith.constant 0 : i32
    %c0_i32_0 = arith.constant 0 : i32
    %c0_i32_1 = arith.constant 0 : i32
    return %arg0, %c0_i32, %c0_i32_0 : i32, i32, i32
  }
}

</mosaic_0001>

<llo_original>
// kernel: tpu_custom_call.1
$region0: #{tpu_custom_call.1}
  #allocation0 [shape = 'u32[]', space=smem, size = 0x4, offset = 0x4, fixed_abs, tag = 'smem constant byte address 0x4 - core index']
  #allocation1 [shape = 'u32[144,128]{1,0:T(1,128)}', space=vmem, size = 0x12000, scoped, tag = 'internal scratch']
  %s0 = inlined_call_operand.hbm [shape: f32[2,16,16], index: 0, kind: input, shape index: {}]
  %s1 = inlined_call_operand.hbm [shape: f32[2,16,16], index: 1, kind: input, shape index: {}]
  %s2 = inlined_call_operand.vmem [shape: f32[2,1,1], index: 2, kind: output, shape index: {0}]
  %s3 = inlined_call_operand.vmem [shape: f32[2,1,1], index: 3, kind: output, shape index: {1}]
  %s4 = inlined_call_operand.vmem [shape: f32[2,1,1], index: 4, kind: output, shape index: {2}]
  %s5 = inlined_call_operand.vmem [shape: f32[2,1,1], index: 5, kind: output, shape index: {3}]
  %6 = xla_tuple %s2, %s3, %s4, %s5
  %s7 = sld [smem:[#allocation0]]
  $region73: #{tpu_custom_call.1} parent=0
    _
  %s9 = ssub.s32 1, %s7
  %s10 = scalar_select 0, %s9, %s7
  $region1: #{tpu_custom_call.1} parent=0
    #allocation2 [shape = 'u8[16384]{0}', space=vmem, size = 0x4000, scoped, tag = 'input window, operand 0']
    #allocation3 [shape = 's32[2]{0}', space=sflag, size = 0x8, scoped, tag = 'scoped memory for tpu_custom_call.1']
    #allocation4 [shape = 'u8[16384]{0}', space=vmem, size = 0x4000, scoped, tag = 'input window, operand 1']
    #allocation5 [shape = 's32[2]{0}', space=sflag, size = 0x8, scoped, tag = 'scoped memory for tpu_custom_call.1']
    %11 = vsyncpa [#allocation3], 0
    %s12 = scalar_lea.sflag [#allocation3], 1
    %13 = vsyncpa %s12, 0
    %14 = vsyncpa [#allocation5], 0
    %s15 = scalar_lea.sflag [#allocation5], 1
    %16 = vsyncpa %s15, 0
    loop: start=0, step=1, limit=4
    $region2: #{tpu_custom_call.1} parent=1 // loop_pre_header
      _
    $region3: #{tpu_custom_call.1} parent=1 // loop_header
      %s18 = sphi 0, %s22
      %p19 = scmp.ge.s32.totalorder %s18, 4
      %s28 = sphi 0, %s30
      %s31 = sphi 0, %s28
      %s32 = sphi 0, %s31
      %s48 = sphi 0, %s32
      %s54 = sphi 0, %s56
      %s57 = sphi 0, %s54
      %s58 = sphi 0, %s57
      %s74 = sphi 0, %s58
      %s80 = sphi 0, %s82
      %s83 = sphi 0, %s80
      %s84 = sphi 0, %s83
      %s100 = sphi 0, %s84
      %s106 = sphi 0, %s108
      %s109 = sphi 0, %s106
      %s110 = sphi 0, %s109
      %s126 = sphi 0, %s110
      %s132 = sphi 0, %s134
      %s135 = sphi 0, %s132
      %s136 = sphi 0, %s135
      %s152 = sphi 0, %s136
      %s158 = sphi 0, %s160
      %s161 = sphi 0, %s158
      %s162 = sphi 0, %s161
      %s178 = sphi 0, %s162
    $region4: #{tpu_custom_call.1} parent=1 // loop_header_branch
      %21 = sbr.rel (%p19) target = $region8
    $region5: #{tpu_custom_call.1} parent=1 // loop_body
      %s23 = ssub.s32 %s18, 1
      %s24 = ssub.s32 %s18, 2
      %s25 = sadd.s32 %s18, 1
      %s26 = ssub.s32 %s18, %s25
      %p27 = scmp.eq.s32.totalorder %s26, 0
      %s29 = sadd.s32 %s28, 1
      %s30 = scalar_select %p27, %s28, %s29
      %p33 = pneg %p27
      %p34 = scmp.eq.s32.totalorder %s18, 1
      %p35 = por %p33, %p34
      %p36 = scmp.ne.s32.totalorder %s28, %s31
      %p37 = scmp.eq.s32.totalorder %s18, 0
      %p38 = por %p36, %p37
      %p39 = scmp.ne.s32.totalorder %s28, %s31
      %p40 = scmp.eq.s32.totalorder %s23, 1
      %p41 = por %p39, %p40
      %p42 = scmp.ne.s32.totalorder %s31, %s32
      %p43 = scmp.eq.s32.totalorder %s23, 0
      %p44 = por %p42, %p43
      %p45 = scmp.ne.s32.totalorder %s31, %s32
      %p46 = scmp.eq.s32.totalorder %s24, 1
      %p47 = por %p45, %p46
      %p49 = scmp.ne.s32.totalorder %s32, %s48
      %p50 = scmp.eq.s32.totalorder %s24, 0
      %p51 = por %p49, %p50
      %s52 = ssub.s32 %s18, %s25
      %p53 = scmp.eq.s32.totalorder %s52, 0
      %s55 = sadd.s32 %s54, 1
      %s56 = scalar_select %p53, %s54, %s55
      %p59 = pneg %p53
      %p60 = scmp.eq.s32.totalorder %s18, 1
      %p61 = por %p59, %p60
      %p62 = scmp.ne.s32.totalorder %s54, %s57
      %p63 = scmp.eq.s32.totalorder %s18, 0
      %p64 = por %p62, %p63
      %p65 = scmp.ne.s32.totalorder %s54, %s57
      %p66 = scmp.eq.s32.totalorder %s23, 1
      %p67 = por %p65, %p66
      %p68 = scmp.ne.s32.totalorder %s57, %s58
      %p69 = scmp.eq.s32.totalorder %s23, 0
      %p70 = por %p68, %p69
      %p71 = scmp.ne.s32.totalorder %s57, %s58
      %p72 = scmp.eq.s32.totalorder %s24, 1
      %p73 = por %p71, %p72
      %p75 = scmp.ne.s32.totalorder %s58, %s74
      %p76 = scmp.eq.s32.totalorder %s24, 0
      %p77 = por %p75, %p76
      %s78 = ssub.s32 %s18, %s25
      %p79 = scmp.eq.s32.totalorder %s78, 0
      %s81 = sadd.s32 %s80, 1
      %s82 = scalar_select %p79, %s80, %s81
      %p85 = pneg %p79
      %p86 = scmp.eq.s32.totalorder %s18, 1
      %p87 = por %p85, %p86
      %p88 = scmp.ne.s32.totalorder %s80, %s83
      %p89 = scmp.eq.s32.totalorder %s18, 0
      %p90 = por %p88, %p89
      %p91 = scmp.ne.s32.totalorder %s80, %s83
      %p92 = scmp.eq.s32.totalorder %s23, 1
      %p93 = por %p91, %p92
      %p94 = scmp.ne.s32.totalorder %s83, %s84
      %p95 = scmp.eq.s32.totalorder %s23, 0
      %p96 = por %p94, %p95
      %p97 = scmp.ne.s32.totalorder %s83, %s84
      %p98 = scmp.eq.s32.totalorder %s24, 1
      %p99 = por %p97, %p98
      %p101 = scmp.ne.s32.totalorder %s84, %s100
      %p102 = scmp.eq.s32.totalorder %s24, 0
      %p103 = por %p101, %p102
      %s104 = ssub.s32 %s18, %s25
      %p105 = scmp.eq.s32.totalorder %s104, 0
      %s107 = sadd.s32 %s106, 1
      %s108 = scalar_select %p105, %s106, %s107
      %p111 = pneg %p105
      %p112 = scmp.eq.s32.totalorder %s18, 1
      %p113 = por %p111, %p112
      %p114 = scmp.ne.s32.totalorder %s106, %s109
      %p115 = scmp.eq.s32.totalorder %s18, 0
      %p116 = por %p114, %p115
      %p117 = scmp.ne.s32.totalorder %s106, %s109
      %p118 = scmp.eq.s32.totalorder %s23, 1
      %p119 = por %p117, %p118
      %p120 = scmp.ne.s32.totalorder %s109, %s110
      %p121 = scmp.eq.s32.totalorder %s23, 0
      %p122 = por %p120, %p121
      %p123 = scmp.ne.s32.totalorder %s109, %s110
      %p124 = scmp.eq.s32.totalorder %s24, 1
      %p125 = por %p123, %p124
      %p127 = scmp.ne.s32.totalorder %s110, %s126
      %p128 = scmp.eq.s32.totalorder %s24, 0
      %p129 = por %p127, %p128
      %s130 = ssub.s32 %s18, %s25
      %p131 = scmp.eq.s32.totalorder %s130, 0
      %s133 = sadd.s32 %s132, 1
      %s134 = scalar_select %p131, %s132, %s133
      %p137 = pneg %p131
      %p138 = scmp.eq.s32.totalorder %s18, 1
      %p139 = por %p137, %p138
      %p140 = scmp.ne.s32.totalorder %s132, %s135
      %p141 = scmp.eq.s32.totalorder %s18, 0
      %p142 = por %p140, %p141
      %p143 = scmp.ne.s32.totalorder %s132, %s135
      %p144 = scmp.eq.s32.totalorder %s23, 1
      %p145 = por %p143, %p144
      %p146 = scmp.ne.s32.totalorder %s135, %s136
      %p147 = scmp.eq.s32.totalorder %s23, 0
      %p148 = por %p146, %p147
      %p149 = scmp.ne.s32.totalorder %s135, %s136
      %p150 = scmp.eq.s32.totalorder %s24, 1
      %p151 = por %p149, %p150
      %p153 = scmp.ne.s32.totalorder %s136, %s152
      %p154 = scmp.eq.s32.totalorder %s24, 0
      %p155 = por %p153, %p154
      %s156 = ssub.s32 %s18, %s25
      %p157 = scmp.eq.s32.totalorder %s156, 0
      %s159 = sadd.s32 %s158, 1
      %s160 = scalar_select %p157, %s158, %s159
      %p163 = pneg %p157
      %p164 = scmp.eq.s32.totalorder %s18, 1
      %p165 = por %p163, %p164
      %p166 = scmp.ne.s32.totalorder %s158, %s161
      %p167 = scmp.eq.s32.totalorder %s18, 0
      %p168 = por %p166, %p167
      %p169 = scmp.ne.s32.totalorder %s158, %s161
      %p170 = scmp.eq.s32.totalorder %s23, 1
      %p171 = por %p169, %p170
      %p172 = scmp.ne.s32.totalorder %s161, %s162
      %p173 = scmp.eq.s32.totalorder %s23, 0
      %p174 = por %p172, %p173
      %p175 = scmp.ne.s32.totalorder %s161, %s162
      %p176 = scmp.eq.s32.totalorder %s24, 1
      %p177 = por %p175, %p176
      %p179 = scmp.ne.s32.totalorder %s162, %s178
      %p180 = scmp.eq.s32.totalorder %s24, 0
      %p181 = por %p179, %p180
      %p182 = scmp.le.s32.totalorder 1, %s18
      %p183 = scmp.lt.s32.totalorder %s18, 3
      %p184 = pnand %p182, %p183
      %p185 = pneg %p184
      // Predicated region
      $region9: #{tpu_custom_call.1} parent=5 // pred_check
        _
      $region10: #{tpu_custom_call.1} parent=5 // pred_check_branch
        %187 = sbr.rel (%p184) target = $region12
      $region11: #{tpu_custom_call.1} parent=5 // pred_region
        %s188 = ssub.s32 %s18, 1
      $region12: #{tpu_custom_call.1} parent=5 // pred_fallthru
        _
      %p189 = scmp.lt.s32.totalorder %s18, 2
      // Predicated region
      $region13: #{tpu_custom_call.1} parent=5 // pred_check
        %p190 = pneg %p189
      $region14: #{tpu_custom_call.1} parent=5 // pred_check_branch
        %192 = sbr.rel (%p190) target = $region16
      $region15: #{tpu_custom_call.1} parent=5 // pred_region
        // Predicated region
        $region17: #{tpu_custom_call.1} parent=15 // pred_check
          %p193 = pneg %p38
        $region18: #{tpu_custom_call.1} parent=15 // pred_check_branch
          %195 = sbr.rel (%p193) target = $region20
        $region19: #{tpu_custom_call.1} parent=15 // pred_region
          %s196 = sand.u32 %s28, 1
          %s197 = scalar_lea.sflag [#allocation3], %s196
          %s198 = sand.u32 %s28, 1
          %s199 = smul.addr %s198, 16
          %s200 = scalar_lea.vmem [#allocation2], %s199
          %s202 = ssub.s32 256, 256
          %203 = vsyncadd %s197, %s202
          %s204 = smul.addr %s18, 2
          %s205 = smul.addr %s204, 128
          %s206 = scalar_lea.hbm %s0, %s205
          %s207 = sshll.u32 %s200, 4
          %s208 = int_to_ptr.vmem [resolvable:$true] %s207
          %213 = dma.hbm_to_vmem [thread:$0]  %s206, 256, %s208, %s197, 128, 128, 8
        $region20: #{tpu_custom_call.1} parent=15 // pred_fallthru
          _
        // Predicated region
        $region21: #{tpu_custom_call.1} parent=15 // pred_check
          %p214 = pneg %p64
        $region22: #{tpu_custom_call.1} parent=15 // pred_check_branch
          %216 = sbr.rel (%p214) target = $region24
        $region23: #{tpu_custom_call.1} parent=15 // pred_region
          %s217 = sand.u32 %s54, 1
          %s218 = scalar_lea.sflag [#allocation5], %s217
          %s219 = sand.u32 %s54, 1
          %s220 = smul.addr %s219, 16
          %s221 = scalar_lea.vmem [#allocation4], %s220
          %s223 = ssub.s32 256, 256
          %224 = vsyncadd %s218, %s223
          %s225 = smul.addr %s18, 2
          %s226 = smul.addr %s225, 128
          %s227 = scalar_lea.hbm %s1, %s226
          %s228 = sshll.u32 %s221, 4
          %s229 = int_to_ptr.vmem [resolvable:$true] %s228
          %234 = dma.hbm_to_vmem [thread:$0]  %s227, 256, %s229, %s218, 128, 128, 8
        $region24: #{tpu_custom_call.1} parent=15 // pred_fallthru
          _
      $region16: #{tpu_custom_call.1} parent=5 // pred_fallthru
        _
      %p235 = scmp.le.s32.totalorder 1, %s18
      %p236 = scmp.lt.s32.totalorder %s18, 3
      %p237 = pnand %p235, %p236
      %p238 = pneg %p237
      // Predicated region
      $region25: #{tpu_custom_call.1} parent=5 // pred_check
        _
      $region26: #{tpu_custom_call.1} parent=5 // pred_check_branch
        %240 = sbr.rel (%p237) target = $region28
      $region27: #{tpu_custom_call.1} parent=5 // pred_region
        %s241 = ssub.s32 %s18, 1
        %s242 = sand.u32 %s31, 1
        %s243 = scalar_lea.sflag [#allocation3], %s242
        %s244 = sand.u32 %s31, 1
        %s245 = smul.addr %s244, 16
        %s246 = scalar_lea.vmem [#allocation2], %s245
        // Predicated region
        $region29: #{tpu_custom_call.1} parent=27 // pred_check
          %p247 = pneg %p44
        $region30: #{tpu_custom_call.1} parent=27 // pred_check_branch
          %249 = sbr.rel (%p247) target = $region32
        $region31: #{tpu_custom_call.1} parent=27 // pred_region
          %250 = dma.done %s243, 256
        $region32: #{tpu_custom_call.1} parent=27 // pred_fallthru
          _
        %s251 = sand.u32 %s57, 1
        %s252 = scalar_lea.sflag [#allocation5], %s251
        %s253 = sand.u32 %s57, 1
        %s254 = smul.addr %s253, 16
        %s255 = scalar_lea.vmem [#allocation4], %s254
        // Predicated region
        $region33: #{tpu_custom_call.1} parent=27 // pred_check
          %p256 = pneg %p70
        $region34: #{tpu_custom_call.1} parent=27 // pred_check_branch
          %258 = sbr.rel (%p256) target = $region36
        $region35: #{tpu_custom_call.1} parent=27 // pred_region
          %259 = dma.done %s252, 256
        $region36: #{tpu_custom_call.1} parent=27 // pred_fallthru
          _
        %s260 = sand.u32 %s31, 1
        %s261 = scalar_lea.sflag [#allocation3], %s260
        %s262 = sand.u32 %s31, 1
        %s263 = smul.addr %s262, 16
        %s264 = scalar_lea.vmem [#allocation2], %s263
        %p265 = pneg %p44
        %p266 = pneg %p41
        %s267 = sand.u32 %s57, 1
        %s268 = scalar_lea.sflag [#allocation5], %s267
        %s269 = sand.u32 %s57, 1
        %s270 = smul.addr %s269, 16
        %s271 = scalar_lea.vmem [#allocation4], %s270
        %p272 = pneg %p70
        %p273 = pneg %p67
        %p274 = pneg %p96
        %p275 = pneg %p93
        %p276 = scmp.lt.s32.totalorder %s23, 1
        %s277 = scalar_select %p276, %s23, 1
        %s278 = scalar_lea.vmem %s2, %s277
        %p279 = pneg %p122
        %p280 = pneg %p119
        %p281 = scmp.lt.s32.totalorder %s23, 1
        %s282 = scalar_select %p281, %s23, 1
        %s283 = scalar_lea.vmem %s3, %s282
        %p284 = pneg %p148
        %p285 = pneg %p145
        %p286 = scmp.lt.s32.totalorder %s23, 1
        %s287 = scalar_select %p286, %s23, 1
        %s288 = scalar_lea.vmem %s4, %s287
        %p289 = pneg %p174
        %p290 = pneg %p171
        %p291 = scmp.lt.s32.totalorder %s23, 1
        %s292 = scalar_select %p291, %s23, 1
        %s293 = scalar_lea.vmem %s5, %s292
        %p294 = scmp.lt.s32.totalorder %s23, 1
        %s295 = scalar_select %p294, %s23, 1
        %s296 = scalar_lea.vmem %s2, %s295
        %p297 = scmp.lt.s32.totalorder %s23, 1
        %s298 = scalar_select %p297, %s23, 1
        %s299 = scalar_lea.vmem %s3, %s298
        %p300 = scmp.lt.s32.totalorder %s23, 1
        %s301 = scalar_select %p300, %s23, 1
        %s302 = scalar_lea.vmem %s4, %s301
        %p303 = scmp.lt.s32.totalorder %s23, 1
        %s304 = scalar_select %p303, %s23, 1
        %s305 = scalar_lea.vmem %s5, %s304
        %v306 = vld [vmem:[%s246] sm:$0xff]
        %v307 = vld [vmem:[%s246 + $0x8] sm:$0xff]
        %v308 = vld [vmem:[%s255] sm:$0xff]
        %v309 = vld [vmem:[%s255 + $0x8] sm:$0xff]
        %v310 = vlaneseq
        %v311 = vshrl.u32 %v310, 7
        %v312 = vadd.s32 %v311, 8
        %v313 = vlaneseq
        %v314 = vand.u32 %v313, 127
        %v315 = vsub.s32 %v311, %v314
        %v316 = vsub.s32 %v312, %v314
        %vm317 = vcmp.lt.s32.totalorder %v315, 0
        %v318 = vsub.s32 0, %v315
        %v319 = vsel %vm317, %v318, %v315
        %vm320 = vcmp.lt.s32.totalorder %v316, 0
        %v321 = vsub.s32 0, %v316
        %v322 = vsel %vm320, %v321, %v316
        %vm323 = vcmp.le.s32.totalorder %v319, 15
        %vm324 = vcmp.le.s32.totalorder %v322, 15
        %v325 = vsel %vm323, 1, 0
        %v326 = vsel %vm324, 1, 0
        %v327 = vcvt.s32.f32 %v325
        %v328 = vcvt.s32.f32 %v326
        %vm329 = vcmp.eq.s32.totalorder %v319, 0
        %vm330 = vcmp.eq.s32.totalorder %v322, 0
        %vm331 = vcmp.eq.s32.totalorder %v319, 1
        %vm332 = vcmp.eq.s32.totalorder %v322, 1
        %v333 = vsel %vm331, 1.0, 0.0
        %v334 = vsel %vm332, 1.0, 0.0
        %v335 = vsel %vm329, -2.0, %v333
        %v336 = vsel %vm330, -2.0, %v334
        %vm337 = vcmask 130048
        %v339 = vsel %vm337, %v308, 0
        %v342 = vsel %vm337, %v309, 0
        %344 = vmatprep.subr.mxu0 0.0
        %345 = vmatpush1.msra.mxu0 0.0
        %346 = vmatprep.subr.mxu0 0.0
        %347 = vmatpush1.msra.mxu0 0.0
        %348 = vmatprep.subr.mxu0 0.0
        %349 = vmatpush1.msra.mxu0 0.0
        %350 = vmatprep.subr.mxu0 0.0
        %351 = vmatpush1.msra.mxu0 0.0
        %352 = vmatprep.subr.mxu0 0.0
        %353 = vmatpush1.msra.mxu0 0.0
        %354 = vmatprep.subr.mxu0 0.0
        %355 = vmatpush1.msra.mxu0 0.0
        %356 = vmatprep.subr.mxu0 0.0
        %357 = vmatpush1.msra.mxu0 0.0
        %358 = vmatprep.subr.mxu0 0.0
        %359 = vmatpush1.msra.mxu0 0.0
        %360 = vmatprep.subr.mxu0 0.0
        %361 = vmatpush1.msra.mxu0 0.0
        %362 = vmatprep.subr.mxu0 0.0
        %363 = vmatpush1.msra.mxu0 0.0
        %364 = vmatprep.subr.mxu0 0.0
        %365 = vmatpush1.msra.mxu0 0.0
        %366 = vmatprep.subr.mxu0 0.0
        %367 = vmatpush1.msra.mxu0 0.0
        %368 = vmatprep.subr.mxu0 0.0
        %369 = vmatpush1.msra.mxu0 0.0
        %370 = vmatprep.subr.mxu0 0.0
        %371 = vmatpush1.msra.mxu0 0.0
        %372 = vmatprep.subr.mxu0 0.0
        %373 = vmatpush1.msra.mxu0 %v328
        %374 = vmatprep.subr.mxu0 0.0
        %375 = vmatpush1.msra.mxu0 %v327
        %376 = vmatprep.subr.mxu0 0.0
        %377 = vmatpush2.msra.mxu0 0.0
        %378 = vmatprep.subr.mxu0 0.0
        %379 = vmatpush2.msra.mxu0 0.0
        %380 = vmatprep.subr.mxu0 0.0
        %381 = vmatpush2.msra.mxu0 0.0
        %382 = vmatprep.subr.mxu0 0.0
        %383 = vmatpush2.msra.mxu0 0.0
        %384 = vmatprep.subr.mxu0 0.0
        %385 = vmatpush2.msra.mxu0 0.0
        %386 = vmatprep.subr.mxu0 0.0
        %387 = vmatpush2.msra.mxu0 0.0
        %388 = vmatprep.subr.mxu0 0.0
        %389 = vmatpush2.msra.mxu0 0.0
        %390 = vmatprep.subr.mxu0 0.0
        %391 = vmatpush2.msra.mxu0 0.0
        %392 = vmatprep.subr.mxu0 0.0
        %393 = vmatpush2.msra.mxu0 0.0
        %394 = vmatprep.subr.mxu0 0.0
        %395 = vmatpush2.msra.mxu0 0.0
        %396 = vmatprep.subr.mxu0 0.0
        %397 = vmatpush2.msra.mxu0 0.0
        %398 = vmatprep.subr.mxu0 0.0
        %399 = vmatpush2.msra.mxu0 0.0
        %400 = vmatprep.subr.mxu0 0.0
        %401 = vmatpush2.msra.mxu0 0.0
        %402 = vmatprep.subr.mxu0 0.0
        %403 = vmatpush2.msra.mxu0 0.0
        %404 = vmatprep.subr.mxu0 0.0
        %405 = vmatpush2.msra.mxu0 0.0
        %406 = vmatprep.subr.mxu0 0.0
        %407 = vmatpush2.msra.mxu0 0.0
        %408 = vmatprep.mubr.f32.mxu0 0.0
        %409 = vmatmul.mubr.f32.gmra.mxu0 %v339
        %v410 = vpop.f32.mrf.mxu0
        %v411 = vadd.f32 0.0, %v410
        %v412 = vpop.f32.mrf.mxu0
        %413 = vmatprep.mubr.f32.mxu0 0.0
        %414 = vmatmul.mubr.f32.gmra.mxu0 %v342
        %v415 = vpop.f32.mrf.mxu0
        %v416 = vadd.f32 0.0, %v415
        %v417 = vpop.f32.mrf.mxu0
        %418 = vdwg.mxu0
        %v420 = vsel %vm337, %v327, 0
        %v423 = vsel %vm337, %v328, 0
        %425 = vmatprep.subr.mxu0 0.0
        %426 = vmatpush1.msra.mxu0 0.0
        %427 = vmatprep.subr.mxu0 0.0
        %428 = vmatpush1.msra.mxu0 0.0
        %429 = vmatprep.subr.mxu0 0.0
        %430 = vmatpush1.msra.mxu0 0.0
        %431 = vmatprep.subr.mxu0 0.0
        %432 = vmatpush1.msra.mxu0 0.0
        %433 = vmatprep.subr.mxu0 0.0
        %434 = vmatpush1.msra.mxu0 0.0
        %435 = vmatprep.subr.mxu0 0.0
        %436 = vmatpush1.msra.mxu0 0.0
        %437 = vmatprep.subr.mxu0 0.0
        %438 = vmatpush1.msra.mxu0 0.0
        %439 = vmatprep.subr.mxu0 0.0
        %440 = vmatpush1.msra.mxu0 0.0
        %441 = vmatprep.subr.mxu0 0.0
        %442 = vmatpush1.msra.mxu0 0.0
        %443 = vmatprep.subr.mxu0 0.0
        %444 = vmatpush1.msra.mxu0 0.0
        %445 = vmatprep.subr.mxu0 0.0
        %446 = vmatpush1.msra.mxu0 0.0
        %447 = vmatprep.subr.mxu0 0.0
        %448 = vmatpush1.msra.mxu0 0.0
        %449 = vmatprep.subr.mxu0 0.0
        %450 = vmatpush1.msra.mxu0 0.0
        %451 = vmatprep.subr.mxu0 0.0
        %452 = vmatpush1.msra.mxu0 0.0
        %453 = vmatprep.subr.mxu0 0.0
        %454 = vmatpush1.msra.mxu0 %v416
        %455 = vmatprep.subr.mxu0 0.0
        %456 = vmatpush1.msra.mxu0 %v411
        %457 = vmatprep.subr.mxu0 0.0
        %458 = vmatpush2.msra.mxu0 0.0
        %459 = vmatprep.subr.mxu0 0.0
        %460 = vmatpush2.msra.mxu0 0.0
        %461 = vmatprep.subr.mxu0 0.0
        %462 = vmatpush2.msra.mxu0 0.0
        %463 = vmatprep.subr.mxu0 0.0
        %464 = vmatpush2.msra.mxu0 0.0
        %465 = vmatprep.subr.mxu0 0.0
        %466 = vmatpush2.msra.mxu0 0.0
        %467 = vmatprep.subr.mxu0 0.0
        %468 = vmatpush2.msra.mxu0 0.0
        %469 = vmatprep.subr.mxu0 0.0
        %470 = vmatpush2.msra.mxu0 0.0
        %471 = vmatprep.subr.mxu0 0.0
        %472 = vmatpush2.msra.mxu0 0.0
        %473 = vmatprep.subr.mxu0 0.0
        %474 = vmatpush2.msra.mxu0 0.0
        %475 = vmatprep.subr.mxu0 0.0
        %476 = vmatpush2.msra.mxu0 0.0
        %477 = vmatprep.subr.mxu0 0.0
        %478 = vmatpush2.msra.mxu0 0.0
        %479 = vmatprep.subr.mxu0 0.0
        %480 = vmatpush2.msra.mxu0 0.0
        %481 = vmatprep.subr.mxu0 0.0
        %482 = vmatpush2.msra.mxu0 0.0
        %483 = vmatprep.subr.mxu0 0.0
        %484 = vmatpush2.msra.mxu0 0.0
        %485 = vmatprep.subr.mxu0 0.0
        %486 = vmatpush2.msra.mxu0 0.0
        %487 = vmatprep.subr.mxu0 0.0
        %488 = vmatpush2.msra.mxu0 0.0
        %489 = vmatprep.mubr.f32.mxu0 0.0
        %490 = vmatmul.mubr.f32.gmra.mxu0 %v420
        %v491 = vpop.f32.mrf.mxu0
        %v492 = vadd.f32 0.0, %v491
        %v493 = vpop.f32.mrf.mxu0
        %494 = vmatprep.mubr.f32.mxu0 0.0
        %495 = vmatmul.mubr.f32.gmra.mxu0 %v423
        %v496 = vpop.f32.mrf.mxu0
        %v497 = vadd.f32 0.0, %v496
        %v498 = vpop.f32.mrf.mxu0
        %499 = vdwg.mxu0
        %v500 = vmul.f32 %v492, 0.0010405828
        %v501 = vmul.f32 %v497, 0.0010405828
        %v502 = vsub.f32 %v500, %v308
        %v503 = vsub.f32 %v501, %v309
        %v504 = vand.u32 2147483647, %v502
        %v505 = vand.u32 2147483647, %v503
        %v506 = vmul.f32 %v504, 5.0
        %v507 = vmul.f32 %v505, 5.0
        %v508 = vadd.f32 %v506, 1.0
        %v509 = vadd.f32 %v507, 1.0
        %v510 = vand.u32 2147483647, %v306
        %v511 = vand.u32 2147483647, %v307
        %v512 = vsub.f32 0.0, %v510
        %v513 = vsub.f32 0.0, %v511
        %v514 = vmul.f32 %v512, 1.442695
        %v515 = vpow.pop %v514
        %v516 = vmul.f32 %v513, 1.442695
        %v517 = vpow.pop %v516
        %v518 = vmax.f32 %v306, 0.0
        %v519 = vmax.f32 %v307, 0.0
        %v520 = vmul.f32 %v306, %v308
        %v521 = vmul.f32 %v307, %v309
        %v522 = vsub.f32 %v518, %v520
        %v523 = vsub.f32 %v519, %v521
        %v524 = vadd.f32 %v515, 1.0
        %v525 = vadd.f32 %v517, 1.0
        %v526 = vlog2.pop %v524
        %v527 = vmul.f32 %v526, 0.6931472
        %v528 = vlog2.pop %v525
        %v529 = vmul.f32 %v528, 0.6931472
        %v530 = vadd.f32 %v522, %v527
        %v531 = vadd.f32 %v523, %v529
        %v532 = vrcp.pop %v524
        %v533 = vmul.f32 1.0, %v532
        %v534 = vrcp.pop %v525
        %v535 = vmul.f32 1.0, %v534
        %vm536 = vcmp.ge.f32.partialorder %v306, 0.0
        %vm537 = vcmp.ge.f32.partialorder %v307, 0.0
        %v538 = vsel %vm536, 1.0, %v515
        %v539 = vsel %vm537, 1.0, %v517
        %v540 = vmul.f32 %v538, %v533
        %v541 = vmul.f32 %v539, %v535
        %v542 = vmul.f32 %v308, %v508
        %v543 = vmul.f32 %v309, %v509
        %v544 = vmul.f32 %v540, %v508
        %v545 = vmul.f32 %v541, %v509
        %v546 = vsel %vm337, %v530, 0.0
        %547 = vadd.xlane.f32.xlu0 %v546
        %v548 = vpop.xlane.xlu0 %547
        %v549 = vsel %vm337, %v531, 0.0
        %550 = vadd.xlane.f32.xlu0 %v549
        %v551 = vpop.xlane.xlu0 %550
        %v552 = vadd.f32 %v548, %v551
        %v553 = vrot.slane %v552, 4
        %v554 = vadd.f32 %v552, %v553
        %v555 = vrot.slane %v554, 2
        %v556 = vadd.f32 %v554, %v555
        %v557 = vrot.slane %v556, 1
        %v558 = vadd.f32 %v556, %v557
        %vm559 = vcmask 0
        %560 = vst.msk [vmem:[%s296] sm:$0x1] %vm559, %v558
        %v561 = vmul.f32 %v542, %v540
        %v562 = vmul.f32 %v543, %v541
        %v563 = vsel %vm337, %v561, 0.0
        %564 = vadd.xlane.f32.xlu0 %v563
        %v565 = vpop.xlane.xlu0 %564
        %v566 = vsel %vm337, %v562, 0.0
        %567 = vadd.xlane.f32.xlu0 %v566
        %v568 = vpop.xlane.xlu0 %567
        %v569 = vadd.f32 %v565, %v568
        %v570 = vrot.slane %v569, 4
        %v571 = vadd.f32 %v569, %v570
        %v572 = vrot.slane %v571, 2
        %v573 = vadd.f32 %v571, %v572
        %v574 = vrot.slane %v573, 1
        %v575 = vadd.f32 %v573, %v574
        %576 = vst.msk [vmem:[%s299] sm:$0x1] %vm559, %v575
        %v577 = vsel %vm337, %v544, 0.0
        %578 = vadd.xlane.f32.xlu0 %v577
        %v579 = vpop.xlane.xlu0 %578
        %v580 = vsel %vm337, %v545, 0.0
        %581 = vadd.xlane.f32.xlu0 %v580
        %v582 = vpop.xlane.xlu0 %581
        %v583 = vadd.f32 %v579, %v582
        %v584 = vrot.slane %v583, 4
        %v585 = vadd.f32 %v583, %v584
        %v586 = vrot.slane %v585, 2
        %v587 = vadd.f32 %v585, %v586
        %v588 = vrot.slane %v587, 1
        %v589 = vadd.f32 %v587, %v588
        %v590 = vsel %vm337, %v542, 0.0
        %591 = vadd.xlane.f32.xlu0 %v590
        %v592 = vpop.xlane.xlu0 %591
        %v593 = vsel %vm337, %v543, 0.0
        %594 = vadd.xlane.f32.xlu0 %v593
        %v595 = vpop.xlane.xlu0 %594
        %v596 = vadd.f32 %v592, %v595
        %v597 = vrot.slane %v596, 4
        %v598 = vadd.f32 %v596, %v597
        %v599 = vrot.slane %v598, 2
        %v600 = vadd.f32 %v598, %v599
        %v601 = vrot.slane %v600, 1
        %v602 = vadd.f32 %v600, %v601
        %v603 = vadd.f32 %v589, %v602
        %604 = vst.msk [vmem:[%s302] sm:$0x1] %vm559, %v603
        %v605 = vsub.f32 %v540, %v308
        %v606 = vsub.f32 %v541, %v309
        %v608 = vsel %vm337, %v605, 0
        %v611 = vsel %vm337, %v606, 0
        %613 = vmatprep.subr.mxu0 0.0
        %614 = vmatpush1.msra.mxu0 0.0
        %615 = vmatprep.subr.mxu0 0.0
        %616 = vmatpush1.msra.mxu0 0.0
        %617 = vmatprep.subr.mxu0 0.0
        %618 = vmatpush1.msra.mxu0 0.0
        %619 = vmatprep.subr.mxu0 0.0
        %620 = vmatpush1.msra.mxu0 0.0
        %621 = vmatprep.subr.mxu0 0.0
        %622 = vmatpush1.msra.mxu0 0.0
        %623 = vmatprep.subr.mxu0 0.0
        %624 = vmatpush1.msra.mxu0 0.0
        %625 = vmatprep.subr.mxu0 0.0
        %626 = vmatpush1.msra.mxu0 0.0
        %627 = vmatprep.subr.mxu0 0.0
        %628 = vmatpush1.msra.mxu0 0.0
        %629 = vmatprep.subr.mxu0 0.0
        %630 = vmatpush1.msra.mxu0 0.0
        %631 = vmatprep.subr.mxu0 0.0
        %632 = vmatpush1.msra.mxu0 0.0
        %633 = vmatprep.subr.mxu0 0.0
        %634 = vmatpush1.msra.mxu0 0.0
        %635 = vmatprep.subr.mxu0 0.0
        %636 = vmatpush1.msra.mxu0 0.0
        %637 = vmatprep.subr.mxu0 0.0
        %638 = vmatpush1.msra.mxu0 0.0
        %639 = vmatprep.subr.mxu0 0.0
        %640 = vmatpush1.msra.mxu0 0.0
        %641 = vmatprep.subr.mxu0 0.0
        %642 = vmatpush1.msra.mxu0 %v336
        %643 = vmatprep.subr.mxu0 0.0
        %644 = vmatpush1.msra.mxu0 %v335
        %645 = vmatprep.subr.mxu0 0.0
        %646 = vmatpush2.msra.mxu0 0.0
        %647 = vmatprep.subr.mxu0 0.0
        %648 = vmatpush2.msra.mxu0 0.0
        %649 = vmatprep.subr.mxu0 0.0
        %650 = vmatpush2.msra.mxu0 0.0
        %651 = vmatprep.subr.mxu0 0.0
        %652 = vmatpush2.msra.mxu0 0.0
        %653 = vmatprep.subr.mxu0 0.0
        %654 = vmatpush2.msra.mxu0 0.0
        %655 = vmatprep.subr.mxu0 0.0
        %656 = vmatpush2.msra.mxu0 0.0
        %657 = vmatprep.subr.mxu0 0.0
        %658 = vmatpush2.msra.mxu0 0.0
        %659 = vmatprep.subr.mxu0 0.0
        %660 = vmatpush2.msra.mxu0 0.0
        %661 = vmatprep.subr.mxu0 0.0
        %662 = vmatpush2.msra.mxu0 0.0
        %663 = vmatprep.subr.mxu0 0.0
        %664 = vmatpush2.msra.mxu0 0.0
        %665 = vmatprep.subr.mxu0 0.0
        %666 = vmatpush2.msra.mxu0 0.0
        %667 = vmatprep.subr.mxu0 0.0
        %668 = vmatpush2.msra.mxu0 0.0
        %669 = vmatprep.subr.mxu0 0.0
        %670 = vmatpush2.msra.mxu0 0.0
        %671 = vmatprep.subr.mxu0 0.0
        %672 = vmatpush2.msra.mxu0 0.0
        %673 = vmatprep.subr.mxu0 0.0
        %674 = vmatpush2.msra.mxu0 0.0
        %675 = vmatprep.subr.mxu0 0.0
        %676 = vmatpush2.msra.mxu0 0.0
        %677 = vmatprep.mubr.f32.mxu0 0.0
        %678 = vmatmul.mubr.f32.gmra.mxu0 %v608
        %v679 = vpop.f32.mrf.mxu0
        %v680 = vadd.f32 0.0, %v679
        %v681 = vpop.f32.mrf.mxu0
        %682 = vmatprep.mubr.f32.mxu0 0.0
        %683 = vmatmul.mubr.f32.gmra.mxu0 %v611
        %v684 = vpop.f32.mrf.mxu0
        %v685 = vadd.f32 0.0, %v684
        %v686 = vpop.f32.mrf.mxu0
        %687 = vdwg.mxu0
        %v689 = vsel %vm337, %v335, 0
        %v692 = vsel %vm337, %v336, 0
        %694 = vmatprep.subr.mxu0 0.0
        %695 = vmatpush1.msra.mxu0 0.0
        %696 = vmatprep.subr.mxu0 0.0
        %697 = vmatpush1.msra.mxu0 0.0
        %698 = vmatprep.subr.mxu0 0.0
        %699 = vmatpush1.msra.mxu0 0.0
        %700 = vmatprep.subr.mxu0 0.0
        %701 = vmatpush1.msra.mxu0 0.0
        %702 = vmatprep.subr.mxu0 0.0
        %703 = vmatpush1.msra.mxu0 0.0
        %704 = vmatprep.subr.mxu0 0.0
        %705 = vmatpush1.msra.mxu0 0.0
        %706 = vmatprep.subr.mxu0 0.0
        %707 = vmatpush1.msra.mxu0 0.0
        %708 = vmatprep.subr.mxu0 0.0
        %709 = vmatpush1.msra.mxu0 0.0
        %710 = vmatprep.subr.mxu0 0.0
        %711 = vmatpush1.msra.mxu0 0.0
        %712 = vmatprep.subr.mxu0 0.0
        %713 = vmatpush1.msra.mxu0 0.0
        %714 = vmatprep.subr.mxu0 0.0
        %715 = vmatpush1.msra.mxu0 0.0
        %716 = vmatprep.subr.mxu0 0.0
        %717 = vmatpush1.msra.mxu0 0.0
        %718 = vmatprep.subr.mxu0 0.0
        %719 = vmatpush1.msra.mxu0 0.0
        %720 = vmatprep.subr.mxu0 0.0
        %721 = vmatpush1.msra.mxu0 0.0
        %722 = vmatprep.subr.mxu0 0.0
        %723 = vmatpush1.msra.mxu0 %v606
        %724 = vmatprep.subr.mxu0 0.0
        %725 = vmatpush1.msra.mxu0 %v605
        %726 = vmatprep.subr.mxu0 0.0
        %727 = vmatpush2.msra.mxu0 0.0
        %728 = vmatprep.subr.mxu0 0.0
        %729 = vmatpush2.msra.mxu0 0.0
        %730 = vmatprep.subr.mxu0 0.0
        %731 = vmatpush2.msra.mxu0 0.0
        %732 = vmatprep.subr.mxu0 0.0
        %733 = vmatpush2.msra.mxu0 0.0
        %734 = vmatprep.subr.mxu0 0.0
        %735 = vmatpush2.msra.mxu0 0.0
        %736 = vmatprep.subr.mxu0 0.0
        %737 = vmatpush2.msra.mxu0 0.0
        %738 = vmatprep.subr.mxu0 0.0
        %739 = vmatpush2.msra.mxu0 0.0
        %740 = vmatprep.subr.mxu0 0.0
        %741 = vmatpush2.msra.mxu0 0.0
        %742 = vmatprep.subr.mxu0 0.0
        %743 = vmatpush2.msra.mxu0 0.0
        %744 = vmatprep.subr.mxu0 0.0
        %745 = vmatpush2.msra.mxu0 0.0
        %746 = vmatprep.subr.mxu0 0.0
        %747 = vmatpush2.msra.mxu0 0.0
        %748 = vmatprep.subr.mxu0 0.0
        %749 = vmatpush2.msra.mxu0 0.0
        %750 = vmatprep.subr.mxu0 0.0
        %751 = vmatpush2.msra.mxu0 0.0
        %752 = vmatprep.subr.mxu0 0.0
        %753 = vmatpush2.msra.mxu0 0.0
        %754 = vmatprep.subr.mxu0 0.0
        %755 = vmatpush2.msra.mxu0 0.0
        %756 = vmatprep.subr.mxu0 0.0
        %757 = vmatpush2.msra.mxu0 0.0
        %758 = vmatprep.mubr.f32.mxu0 0.0
        %759 = vmatmul.mubr.f32.gmra.mxu0 %v689
        %v760 = vpop.f32.mrf.mxu0
        %v761 = vadd.f32 %v680, %v760
        %v762 = vpop.f32.mrf.mxu0
        %763 = vmatprep.mubr.f32.mxu0 0.0
        %764 = vmatmul.mubr.f32.gmra.mxu0 %v692
        %v765 = vpop.f32.mrf.mxu0
        %v766 = vadd.f32 %v685, %v765
        %v767 = vpop.f32.mrf.mxu0
        %768 = vdwg.mxu0
        %v769 = vand.u32 2147483647, %v761
        %v770 = vand.u32 2147483647, %v766
        %v771 = vsel %vm337, %v769, 0.0
        %772 = vadd.xlane.f32.xlu0 %v771
        %v773 = vpop.xlane.xlu0 %772
        %v774 = vsel %vm337, %v770, 0.0
        %775 = vadd.xlane.f32.xlu0 %v774
        %v776 = vpop.xlane.xlu0 %775
        %v777 = vadd.f32 %v773, %v776
        %v778 = vrot.slane %v777, 4
        %v779 = vadd.f32 %v777, %v778
        %v780 = vrot.slane %v779, 2
        %v781 = vadd.f32 %v779, %v780
        %v782 = vrot.slane %v781, 1
        %v783 = vadd.f32 %v781, %v782
        %784 = vst.msk [vmem:[%s305] sm:$0x1] %vm559, %v783
        %p785 = scmp.lt.s32.totalorder %s23, 1
        %s786 = scalar_select %p785, %s23, 1
        %s787 = scalar_lea.vmem %s2, %s786
        %p788 = scmp.lt.s32.totalorder %s23, 1
        %s789 = scalar_select %p788, %s23, 1
        %s790 = scalar_lea.vmem %s3, %s789
        %p791 = scmp.lt.s32.totalorder %s23, 1
        %s792 = scalar_select %p791, %s23, 1
        %s793 = scalar_lea.vmem %s4, %s792
        %p794 = scmp.lt.s32.totalorder %s23, 1
        %s795 = scalar_select %p794, %s23, 1
        %s796 = scalar_lea.vmem %s5, %s795
        // Predicated region
        $region37: #{tpu_custom_call.1} parent=27 // pred_check
          %p797 = pneg %p93
        $region38: #{tpu_custom_call.1} parent=27 // pred_check_branch
          %799 = sbr.rel (%p797) target = $region40
        $region39: #{tpu_custom_call.1} parent=27 // pred_region
          _
        $region40: #{tpu_custom_call.1} parent=27 // pred_fallthru
          _
        // Predicated region
        $region41: #{tpu_custom_call.1} parent=27 // pred_check
          %p800 = pneg %p119
        $region42: #{tpu_custom_call.1} parent=27 // pred_check_branch
          %802 = sbr.rel (%p800) target = $region44
        $region43: #{tpu_custom_call.1} parent=27 // pred_region
          _
        $region44: #{tpu_custom_call.1} parent=27 // pred_fallthru
          _
        // Predicated region
        $region45: #{tpu_custom_call.1} parent=27 // pred_check
          %p803 = pneg %p145
        $region46: #{tpu_custom_call.1} parent=27 // pred_check_branch
          %805 = sbr.rel (%p803) target = $region48
        $region47: #{tpu_custom_call.1} parent=27 // pred_region
          _
        $region48: #{tpu_custom_call.1} parent=27 // pred_fallthru
          _
        // Predicated region
        $region49: #{tpu_custom_call.1} parent=27 // pred_check
          %p806 = pneg %p171
        $region50: #{tpu_custom_call.1} parent=27 // pred_check_branch
          %808 = sbr.rel (%p806) target = $region52
        $region51: #{tpu_custom_call.1} parent=27 // pred_region
          _
        $region52: #{tpu_custom_call.1} parent=27 // pred_fallthru
          _
      $region28: #{tpu_custom_call.1} parent=5 // pred_fallthru
        _
      %p809 = scmp.le.s32.totalorder 2, %s18
      // Predicated region
      $region53: #{tpu_custom_call.1} parent=5 // pred_check
        %p810 = pneg %p809
      $region54: #{tpu_custom_call.1} parent=5 // pred_check_branch
        %812 = sbr.rel (%p810) target = $region56
      $region55: #{tpu_custom_call.1} parent=5 // pred_region
        %s813 = ssub.s32 %s18, 2
        // Predicated region
        $region57: #{tpu_custom_call.1} parent=55 // pred_check
          %p814 = pneg %p99
        $region58: #{tpu_custom_call.1} parent=55 // pred_check_branch
          %816 = sbr.rel (%p814) target = $region60
        $region59: #{tpu_custom_call.1} parent=55 // pred_region
          %p817 = scmp.lt.s32.totalorder %s24, 1
          %s818 = scalar_select %p817, %s24, 1
          %s819 = scalar_lea.vmem %s2, %s818
        $region60: #{tpu_custom_call.1} parent=55 // pred_fallthru
          _
        // Predicated region
        $region61: #{tpu_custom_call.1} parent=55 // pred_check
          %p820 = pneg %p125
        $region62: #{tpu_custom_call.1} parent=55 // pred_check_branch
          %822 = sbr.rel (%p820) target = $region64
        $region63: #{tpu_custom_call.1} parent=55 // pred_region
          %p823 = scmp.lt.s32.totalorder %s24, 1
          %s824 = scalar_select %p823, %s24, 1
          %s825 = scalar_lea.vmem %s3, %s824
        $region64: #{tpu_custom_call.1} parent=55 // pred_fallthru
          _
        // Predicated region
        $region65: #{tpu_custom_call.1} parent=55 // pred_check
          %p826 = pneg %p151
        $region66: #{tpu_custom_call.1} parent=55 // pred_check_branch
          %828 = sbr.rel (%p826) target = $region68
        $region67: #{tpu_custom_call.1} parent=55 // pred_region
          %p829 = scmp.lt.s32.totalorder %s24, 1
          %s830 = scalar_select %p829, %s24, 1
          %s831 = scalar_lea.vmem %s4, %s830
        $region68: #{tpu_custom_call.1} parent=55 // pred_fallthru
          _
        // Predicated region
        $region69: #{tpu_custom_call.1} parent=55 // pred_check
          %p832 = pneg %p177
        $region70: #{tpu_custom_call.1} parent=55 // pred_check_branch
          %834 = sbr.rel (%p832) target = $region72
        $region71: #{tpu_custom_call.1} parent=55 // pred_region
          %p835 = scmp.lt.s32.totalorder %s24, 1
          %s836 = scalar_select %p835, %s24, 1
          %s837 = scalar_lea.vmem %s5, %s836
        $region72: #{tpu_custom_call.1} parent=55 // pred_fallthru
          _
      $region56: #{tpu_custom_call.1} parent=5 // pred_fallthru
        _
    $region6: #{tpu_custom_call.1} parent=1 // loop_footer
      %s22 = sadd.s32 1, %s18
    $region7: #{tpu_custom_call.1} parent=1 // loop_footer_branch
      %17 = sbr.rel target = $region3
    $region8: #{tpu_custom_call.1} parent=1 // loop_exit
      _
    %838 = vsyncpa [#allocation3], 1
    %s839 = scalar_lea.sflag [#allocation3], 1
    %840 = vsyncpa %s839, 1
    %841 = vsyncpa [#allocation5], 1
    %s842 = scalar_lea.sflag [#allocation5], 1
    %843 = vsyncpa %s842, 1

</llo_original>
